<compile_context>
chip_gen: v5e
topology: v5e:2x2
jax: 0.10.0
libtpu: 0.0.40
codegen_flags: <defaults>
</compile_context>

<pallas_src>
import functools

import jax
import jax.numpy as jnp
from jax.experimental import pallas as pl
from jax.experimental.pallas import tpu as pltpu


def _pfld_loss_kernel(small_ref, lgt_ref, lmk_ref, out_ref, *,
                      n_attr, train_batchsize, inv_batch):
    """Whole-batch PFLD loss in a single VMEM block.

    small_ref : [B, n_attr + 6] f32  = [attribute_gt | angle | euler_angle_gt]
    lgt_ref   : [B, L]               landmark_gt
    lmk_ref   : [B, L]               landmark (prediction)
    out_ref   : (2,) f32 SMEM        (weighted-loss mean, plain l2 mean)
    """
    small = small_ref[...]                                            # [B, K]
    col = jax.lax.broadcasted_iota(jnp.int32, small.shape, 1)

    # --- attribute weights: in-kernel equivalent of attribute_gt[:, 1:6] ----
    hi = min(6, n_attr)
    attrs = jnp.where((col >= 1) & (col < hi), small, 0.0)            # [B, K]

    # mat_ratio[c] = 1/mean_c if mean_c > 0 else train_batchsize.
    # NOTE: divisor is the *global* batch size (static), not the block shape.
    mat_mean = jnp.sum(attrs, axis=0, keepdims=True) * inv_batch      # [1, K]
    pos = mat_mean > 0.0
    safe_mean = jnp.where(pos, mat_mean, 1.0)     # keep inf/NaN off the EUP
    inv_mean = pl.reciprocal(safe_mean, approx=True)                  # EUP seed
    inv_mean = inv_mean * (2.0 - safe_mean * inv_mean)                # 1 Newton step
    mat_ratio = jnp.where(pos, inv_mean, jnp.float32(train_batchsize))
    weight_attribute = jnp.sum(attrs * mat_ratio, axis=1,
                               keepdims=True)                         # [B, 1]

    # --- angle weights -------------------------------------------------------
    ang = small[:, n_attr:n_attr + 3]                                 # [B, 3]
    eul = small[:, n_attr + 3:n_attr + 6]                             # [B, 3]
    weight_angle = jnp.sum(1.0 - jnp.cos(ang - eul), axis=1,
                           keepdims=True)                             # [B, 1]

    # --- landmark L2 ---------------------------------------------------------
    d = lgt_ref[...].astype(jnp.float32) - lmk_ref[...].astype(jnp.float32)
    l2 = jnp.sum(d * d, axis=1, keepdims=True)                        # [B, 1]

    # --- single fused sublane reduction for both outputs --------------------
    # lane 0 carries weight_angle*weight_attribute*l2, lane 1 carries l2.
    col2 = jax.lax.broadcasted_iota(jnp.int32, (l2.shape[0], 2), 1)
    mult = jnp.where(col2 == 0, weight_angle * weight_attribute, 1.0)  # [B, 2]
    totals = jnp.sum(mult * l2, axis=0, keepdims=True)                 # [1, 2]
    out_ref[0] = totals[0, 0] * inv_batch
    out_ref[1] = totals[0, 1] * inv_batch


def _round_up(x, m):
    return ((x + m - 1) // m) * m


@functools.partial(jax.jit, static_argnums=(5,))
def pfld_loss(attribute_gt, landmark_gt, euler_angle_gt, angle, landmark,
              train_batchsize):
    B, n_attr = attribute_gt.shape
    L = landmark_gt.shape[1]
    ktot = n_attr + 6

    # TODO(synk): ideally the producer emits this [B, n_attr+6] tensor directly;
    # concatenating the three tiny arrays here (a few hundred bytes) still nets
    # out positive because it removes two HBM->VMEM DMAs from the kernel prologue.
    small = jnp.concatenate(
        [attribute_gt.astype(jnp.float32),
         angle.astype(jnp.float32),
         euler_angle_gt.astype(jnp.float32)], axis=1)

    kernel = functools.partial(
        _pfld_loss_kernel,
        n_attr=n_attr,
        train_batchsize=float(train_batchsize),
        inv_batch=1.0 / float(B))

    # VMEM budget sized from the actual (padded) tiles, with generous headroom,
    # so large B does not trip the default scoped-VMEM limit (16 MiB on v5e).
    need = 4 * 2 * (_round_up(B, 8) * _round_up(ktot, 128)
                    + 2 * _round_up(B, 8) * _round_up(L, 128)) + (2 << 20)
    vmem_limit = int(min(max(need, 8 << 20), 100 << 20))

    cost = pl.CostEstimate(
        flops=int(3 * B * L + 4 * B * ktot + 10 * B),
        transcendentals=int(3 * B + n_attr),
        bytes_accessed=int(4 * (B * ktot + 2 * B * L) + 8))

    out = pl.pallas_call(
        kernel,
        out_shape=jax.ShapeDtypeStruct((2,), jnp.float32),
        in_specs=[
            pl.BlockSpec(memory_space=pltpu.MemorySpace.VMEM),   # small (concat)
            pl.BlockSpec(memory_space=pltpu.MemorySpace.VMEM),   # landmark_gt
            pl.BlockSpec(memory_space=pltpu.MemorySpace.VMEM),   # landmark
        ],
        out_specs=pl.BlockSpec(memory_space=pltpu.MemorySpace.SMEM),
        compiler_params=pltpu.CompilerParams(vmem_limit_bytes=vmem_limit),
        cost_estimate=cost,
    )(small, landmark_gt, landmark)
    return out[0], out[1]


def _pfld_loss_ref(attribute_gt, landmark_gt, euler_angle_gt, angle, landmark,
                   train_batchsize):
    weight_angle = jnp.sum(1.0 - jnp.cos(angle - euler_angle_gt), axis=1)
    attributes = attribute_gt[:, 1:6].astype(jnp.float32)
    mat_mean = jnp.mean(attributes, axis=0)
    mat_ratio = jnp.where(mat_mean > 0.0, 1.0 / mat_mean,
                          jnp.float32(train_batchsize))
    weight_attribute = jnp.sum(attributes * mat_ratio, axis=1)
    l2 = jnp.sum((landmark_gt - landmark) ** 2, axis=1)
    return jnp.mean(weight_angle * weight_attribute * l2), jnp.mean(l2)


if __name__ == "__main__":
    B, L = 8, 16          # 8 samples, 8 landmarks * 2 coords
    train_batchsize = B

    key = jax.random.PRNGKey(0)
    k1, k2, k3, k4, k5 = jax.random.split(key, 5)

    attribute_gt = (jax.random.uniform(k1, (B, 6)) > 0.5).astype(jnp.float32)
    attribute_gt = attribute_gt.at[:, 3].set(0.0)   # exercise the "else bs" branch
    landmark_gt = jax.random.normal(k2, (B, L), jnp.float32)
    euler_angle_gt = jax.random.normal(k3, (B, 3), jnp.float32)
    angle = jax.random.normal(k4, (B, 3), jnp.float32)
    landmark = jax.random.normal(k5, (B, L), jnp.float32)

    loss, l2_mean = pfld_loss(attribute_gt, landmark_gt, euler_angle_gt,
                              angle, landmark, train_batchsize)
    jax.block_until_ready((loss, l2_mean))

    loss_ref, l2_ref = _pfld_loss_ref(attribute_gt, landmark_gt,
                                      euler_angle_gt, angle, landmark,
                                      train_batchsize)
    assert jnp.allclose(loss, loss_ref, rtol=1e-4, atol=1e-5), (loss, loss_ref)
    assert jnp.allclose(l2_mean, l2_ref, rtol=1e-4, atol=1e-5), (l2_mean, l2_ref)

    print("KERNEL_OK")
</pallas_src>

<mosaic_0001>
module attributes {stable_mosaic.version = 11 : i64} {
  func.func @_pfld_loss_kernel(%arg0: memref<8x12xf32, #tpu.memory_space<vmem>>, %arg1: memref<8x16xf32, #tpu.memory_space<vmem>>, %arg2: memref<8x16xf32, #tpu.memory_space<vmem>>, %arg3: memref<2xf32, #tpu.memory_space<smem>>) attributes {dimension_semantics = [], scalar_prefetch = 0 : i64, scratch_operands = 0 : i64, tpu.core_type = #tpu.core_type<tc>} {
    %c0 = arith.constant 0 : index
    %c0_0 = arith.constant 0 : index
    %0 = vector.load %arg0[%c0, %c0_0] : memref<8x12xf32, #tpu.memory_space<vmem>>, vector<8x12xf32>
    %1 = tpu.iota {dimensions = array<i32: 1>} : vector<8x12xi32>
    %c1_i32 = arith.constant 1 : i32
    %2 = vector.broadcast %c1_i32 : i32 to vector<8x12xi32>
    %3 = arith.cmpi sge, %1, %2 : vector<8x12xi32>
    %c6_i32 = arith.constant 6 : i32
    %4 = vector.broadcast %c6_i32 : i32 to vector<8x12xi32>
    %5 = arith.cmpi slt, %1, %4 : vector<8x12xi32>
    %6 = arith.andi %3, %5 : vector<8x12xi1>
    %cst = arith.constant 0.000000e+00 : f32
    %7 = vector.broadcast %cst : f32 to vector<8x12xf32>
    %8 = arith.select %6, %0, %7 : vector<8x12xi1>, vector<8x12xf32>
    %cst_1 = arith.constant dense<0.000000e+00> : vector<12xf32>
    %9 = vector.multi_reduction <add>, %8, %cst_1 [0] : vector<8x12xf32> to vector<12xf32>
    %10 = vector.shape_cast %9 : vector<12xf32> to vector<1x12xf32>
    %cst_2 = arith.constant 1.250000e-01 : f32
    %11 = vector.broadcast %cst_2 : f32 to vector<1x12xf32>
    %12 = arith.mulf %10, %11 : vector<1x12xf32>
    %cst_3 = arith.constant 0.000000e+00 : f32
    %13 = vector.broadcast %cst_3 : f32 to vector<1x12xf32>
    %14 = arith.cmpf ogt, %12, %13 : vector<1x12xf32>
    %cst_4 = arith.constant 1.000000e+00 : f32
    %15 = vector.broadcast %cst_4 : f32 to vector<1x12xf32>
    %16 = arith.select %14, %12, %15 : vector<1x12xi1>, vector<1x12xf32>
    %17 = tpu.reciprocal %16 {approx = true} : vector<1x12xf32> -> vector<1x12xf32>
    %18 = arith.mulf %16, %17 : vector<1x12xf32>
    %cst_5 = arith.constant 2.000000e+00 : f32
    %19 = vector.broadcast %cst_5 : f32 to vector<1x12xf32>
    %20 = arith.subf %19, %18 : vector<1x12xf32>
    %21 = arith.mulf %17, %20 : vector<1x12xf32>
    %cst_6 = arith.constant 8.000000e+00 : f32
    %22 = vector.broadcast %cst_6 : f32 to vector<1x12xf32>
    %23 = arith.select %14, %21, %22 : vector<1x12xi1>, vector<1x12xf32>
    %24 = vector.broadcast %23 : vector<1x12xf32> to vector<8x12xf32>
    %25 = arith.mulf %8, %24 : vector<8x12xf32>
    %cst_7 = arith.constant dense<0.000000e+00> : vector<8xf32>
    %26 = vector.multi_reduction <add>, %25, %cst_7 [1] : vector<8x12xf32> to vector<8xf32>
    %27 = vector.shape_cast %26 : vector<8xf32> to vector<8x1xf32>
    %28 = vector.extract_strided_slice %0 {offsets = [0, 6], sizes = [8, 3], strides = [1, 1]} : vector<8x12xf32> to vector<8x3xf32>
    %29 = vector.extract_strided_slice %0 {offsets = [0, 9], sizes = [8, 3], strides = [1, 1]} : vector<8x12xf32> to vector<8x3xf32>
    %30 = arith.subf %28, %29 : vector<8x3xf32>
    %31 = math.cos %30 : vector<8x3xf32>
    %cst_8 = arith.constant 1.000000e+00 : f32
    %32 = vector.broadcast %cst_8 : f32 to vector<8x3xf32>
    %33 = arith.subf %32, %31 : vector<8x3xf32>
    %cst_9 = arith.constant dense<0.000000e+00> : vector<8xf32>
    %34 = vector.multi_reduction <add>, %33, %cst_9 [1] : vector<8x3xf32> to vector<8xf32>
    %35 = vector.shape_cast %34 : vector<8xf32> to vector<8x1xf32>
    %c0_10 = arith.constant 0 : index
    %c0_11 = arith.constant 0 : index
    %36 = vector.load %arg1[%c0_10, %c0_11] : memref<8x16xf32, #tpu.memory_space<vmem>>, vector<8x16xf32>
    %c0_12 = arith.constant 0 : index
    %c0_13 = arith.constant 0 : index
    %37 = vector.load %arg2[%c0_12, %c0_13] : memref<8x16xf32, #tpu.memory_space<vmem>>, vector<8x16xf32>
    %38 = arith.subf %36, %37 : vector<8x16xf32>
    %39 = arith.mulf %38, %38 : vector<8x16xf32>
    %cst_14 = arith.constant dense<0.000000e+00> : vector<8xf32>
    %40 = vector.multi_reduction <add>, %39, %cst_14 [1] : vector<8x16xf32> to vector<8xf32>
    %41 = vector.shape_cast %40 : vector<8xf32> to vector<8x1xf32>
    %42 = tpu.iota {dimensions = array<i32: 1>} : vector<8x2xi32>
    %c0_i32 = arith.constant 0 : i32
    %43 = vector.broadcast %c0_i32 : i32 to vector<8x2xi32>
    %44 = arith.cmpi eq, %42, %43 : vector<8x2xi32>
    %45 = arith.mulf %35, %27 : vector<8x1xf32>
    %cst_15 = arith.constant 1.000000e+00 : f32
    %46 = vector.shape_cast %45 : vector<8x1xf32> to vector<8x1xf32>
    %47 = vector.broadcast %46 : vector<8x1xf32> to vector<8x2xf32>
    %48 = vector.broadcast %cst_15 : f32 to vector<8x2xf32>
    %49 = arith.select %44, %47, %48 : vector<8x2xi1>, vector<8x2xf32>
    %50 = vector.broadcast %41 : vector<8x1xf32> to vector<8x2xf32>
    %51 = arith.mulf %49, %50 : vector<8x2xf32>
    %cst_16 = arith.constant dense<0.000000e+00> : vector<2xf32>
    %52 = vector.multi_reduction <add>, %51, %cst_16 [0] : vector<8x2xf32> to vector<2xf32>
    %53 = vector.shape_cast %52 : vector<2xf32> to vector<1x2xf32>
    %54 = vector.extract_strided_slice %53 {offsets = [0, 0], sizes = [1, 1], strides = [1, 1]} : vector<1x2xf32> to vector<1x1xf32>
    %55 = vector.extract %54[0, 0] : f32 from vector<1x1xf32>
    %cst_17 = arith.constant 1.250000e-01 : f32
    %56 = arith.mulf %55, %cst_17 : f32
    %c0_18 = arith.constant 0 : index
    %57 = memref.load %arg3[%c0_18] : memref<2xf32, #tpu.memory_space<smem>>
    memref.store %56, %arg3[%c0_18] : memref<2xf32, #tpu.memory_space<smem>>
    %58 = vector.extract_strided_slice %53 {offsets = [0, 1], sizes = [1, 1], strides = [1, 1]} : vector<1x2xf32> to vector<1x1xf32>
    %59 = vector.extract %58[0, 0] : f32 from vector<1x1xf32>
    %cst_19 = arith.constant 1.250000e-01 : f32
    %60 = arith.mulf %59, %cst_19 : f32
    %c1 = arith.constant 1 : index
    %61 = memref.load %arg3[%c1] : memref<2xf32, #tpu.memory_space<smem>>
    memref.store %60, %arg3[%c1] : memref<2xf32, #tpu.memory_space<smem>>
    return
  }
}

</mosaic_0001>

<llo_original>
// kernel: pfld_loss.1
$region0: #{pfld_loss.1}
  #allocation0 [shape = 'u32[]', space=smem, size = 0x4, offset = 0x4, fixed_abs, tag = 'smem constant byte address 0x4 - core index']
  #allocation1 [shape = 'u32[72,128]{1,0:T(1,128)}', space=vmem, size = 0x9000, scoped, tag = 'internal scratch']
  %s0 = inlined_call_operand.vmem [shape: f32[8,12], index: 0, kind: input, shape index: {}]
  %s1 = inlined_call_operand.vmem [shape: f32[8,16], index: 1, kind: input, shape index: {}]
  %s2 = inlined_call_operand.vmem [shape: f32[8,16], index: 2, kind: input, shape index: {}]
  %s3 = inlined_call_operand.vmem [shape: f32[2], index: 3, kind: output, shape index: {}]
  %s4 = sld [smem:[#allocation0]]
  $region22: #{pfld_loss.1} parent=0
    _
  %s6 = ssub.s32 1, %s4
  %s7 = scalar_select 0, %s6, %s4
  $region1: #{pfld_loss.1} parent=0
    #allocation2 [shape = 'u8[512]{0}', space=smem, size = 0x200, scoped, tag = 'output window, operand 0, single buffered']
    #allocation3 [shape = 's32[1]{0}', space=sflag, size = 0x4, scoped, tag = 'scoped memory for pfld_loss.1']
    %8 = vsyncpa [#allocation3], 0
    // Predicated region
    $region2: #{pfld_loss.1} parent=1 // pred_check
      _
    $region3: #{pfld_loss.1} parent=1 // pred_check_branch
      %10 = sbr.rel (0) target = $region5
    $region4: #{pfld_loss.1} parent=1 // pred_region
      _
    $region5: #{pfld_loss.1} parent=1 // pred_fallthru
      _
    // Predicated region
    $region6: #{pfld_loss.1} parent=1 // pred_check
      _
    $region7: #{pfld_loss.1} parent=1 // pred_check_branch
      %12 = sbr.rel (0) target = $region9
    $region8: #{pfld_loss.1} parent=1 // pred_region
      _
    $region9: #{pfld_loss.1} parent=1 // pred_fallthru
      _
    // Predicated region
    $region10: #{pfld_loss.1} parent=1 // pred_check
      _
    $region11: #{pfld_loss.1} parent=1 // pred_check_branch
      %14 = sbr.rel (0) target = $region13
    $region12: #{pfld_loss.1} parent=1 // pred_region
      _
    $region13: #{pfld_loss.1} parent=1 // pred_fallthru
      _
    %v15 = vld [vmem:[%s0] sm:$0xff]
    %v16 = vlaneseq
    %v17 = vand.u32 %v16, 127
    %vm18 = vcmp.ge.s32.totalorder %v17, 1
    %vm19 = vcmp.lt.s32.totalorder %v17, 6
    %vm20 = vmand %vm18, %vm19
    %v21 = vsel %vm20, %v15, 0.0
    %vm22 = vcmask 97280
    %v23 = vsel %vm22, %v21, 0.0
    %v24 = vrot.slane %v23, 4
    %v25 = vadd.f32 %v23, %v24
    %v26 = vrot.slane %v25, 2
    %v27 = vadd.f32 %v25, %v26
    %v28 = vrot.slane %v27, 1
    %v29 = vadd.f32 %v27, %v28
    %v30 = vmul.f32 %v29, 0.125
    %vm31 = vcmp.gt.f32.partialorder %v30, 0.0
    %v32 = vsel %vm31, %v30, 1.0
    %v33 = vrcp.pop %v32
    %v34 = vmul.f32 %v32, %v33
    %v35 = vsub.f32 2.0, %v34
    %v36 = vmul.f32 %v33, %v35
    %v37 = vsel %vm31, %v36, 8.0
    %v38 = vmul.f32 %v21, %v37
    %v39 = vsel %vm22, %v38, 0.0
    %40 = vadd.xlane.f32.xlu0 %v39
    %v41 = vpop.xlane.xlu0 %40
    %43 = vrot.lane.b32.xlu0 %v15, 125
    %v44 = vpop.permute.xlu0 %43
    %v46 = vsub.f32 %v15, %v44
    %v47 = vand.u32 2147483647, %v46
    %vm48 = vcmp.le.f32.partialorder %v47, 0.7853982
    %vm49 = vcmp.lt.s32.totalorder %v46, 0
    %v50 = vand.u32 %v46, 2139095040
    %v51 = vshrl.u32 %v50, 23
    %v52 = vsub.s32 %v51, 127
    %v53 = vand.u32 2147483647, %v46
    %v54 = vand.u32 %v53, 8388607
    %v55 = vor.u32 %v54, 8388608
    %v56 = vsub.s32 0, %v55
    %v57 = vadd.s32 %v52, 1
    %vm58 = vcmp.gt.s32.totalorder %v57, 0
    %v59 = vsel %vm58, %v57, 0
    %v60 = vshrl.u32 %v59, 5
    %v61 = vand.u32 %v59, 31
    %v62 = vsub.s32 32, %v61
    %v63 = vshrl.u32 683565275, %v62
    %v64 = vshll.u32 683565275, %v61
    %v65 = vshrl.u32 2475754826, %v62
    %v66 = vor.u32 %v64, %v65
    %v67 = vshll.u32 2475754826, %v61
    %v68 = vshrl.u32 2131351028, %v62
    %v69 = vor.u32 %v67, %v68
    %v70 = vshll.u32 2131351028, %v61
    %v71 = vshrl.u32 2102212464, %v62
    %v72 = vor.u32 %v70, %v71
    %v73 = vshll.u32 2102212464, %v61
    %v74 = vshrl.u32 920167782, %v62
    %v75 = vor.u32 %v73, %v74
    %v76 = vshll.u32 920167782, %v61
    %v77 = vshrl.u32 1326507024, %v62
    %v78 = vor.u32 %v76, %v77
    %vm79 = vcmp.lt.s32.totalorder %v60, 1
    %vm80 = vcmp.lt.s32.totalorder %v60, 2
    %vm81 = vcmp.lt.s32.totalorder %v60, 3
    %vm82 = vcmp.lt.s32.totalorder %v60, 4
    %v83 = vsel %vm79, %v63, %v66
    %v84 = vsel %vm82, %v72, 2102212464
    %v85 = vsel %vm81, %v69, %v84
    %v86 = vsel %vm80, %v83, %v85
    %v87 = vsel %vm79, %v66, %v69
    %v88 = vsel %vm82, %v75, 920167782
    %v89 = vsel %vm81, %v72, %v88
    %v90 = vsel %vm80, %v87, %v89
    %v91 = vsel %vm79, %v69, %v72
    %v92 = vsel %vm82, %v78, 1326507024
    %v93 = vsel %vm81, %v75, %v92
    %v94 = vsel %vm80, %v91, %v93
    %v95 = vshll.u32 %v55, 8
    %v96 = vand.u32 %v95, 65535
    %v97 = vshrl.u32 %v95, 16
    %v98 = vand.u32 %v94, 65535
    %v99 = vshrl.u32 %v94, 16
    %v100 = vmul.u32 %v96, %v98
    %v101 = vmul.u32 %v96, %v99
    %v102 = vmul.u32 %v97, %v98
    %v103 = vmul.u32 %v97, %v99
    %v104 = vshll.u32 %v101, 16
    %v105 = vshrl.u32 %v101, 16
    %v106 = vshll.u32 %v102, 16
    %v107 = vshrl.u32 %v102, 16
    %vm108 = vc.u32 %v100, %v104
    %v109 = vsel %vm108, 1, 0
    %v110 = vadd.s32 %v100, %v104
    %v111 = vadd.s32 %v103, %v109
    %vm112 = vc.u32 %v110, %v106
    %v113 = vsel %vm112, 1, 0
    %v114 = vadd.s32 %v110, %v106
    %v115 = vadd.s32 %v111, %v113
    %v116 = vadd.s32 %v115, %v105
    %v117 = vadd.s32 %v116, %v107
    %v118 = vand.u32 %v95, 65535
    %v119 = vshrl.u32 %v95, 16
    %v120 = vand.u32 %v90, 65535
    %v121 = vshrl.u32 %v90, 16
    %v122 = vmul.u32 %v118, %v120
    %v123 = vmul.u32 %v118, %v121
    %v124 = vmul.u32 %v119, %v120
    %v125 = vmul.u32 %v119, %v121
    %v126 = vshll.u32 %v123, 16
    %v127 = vshrl.u32 %v123, 16
    %v128 = vshll.u32 %v124, 16
    %v129 = vshrl.u32 %v124, 16
    %vm130 = vc.u32 %v122, %v126
    %v131 = vsel %vm130, 1, 0
    %v132 = vadd.s32 %v122, %v126
    %v133 = vadd.s32 %v125, %v131
    %vm134 = vc.u32 %v132, %v128
    %v135 = vsel %vm134, 1, 0
    %v136 = vadd.s32 %v132, %v128
    %v137 = vadd.s32 %v133, %v135
    %v138 = vadd.s32 %v137, %v127
    %v139 = vadd.s32 %v138, %v129
    %v140 = vmul.u32 %v95, %v86
    %v141 = vadd.s32 %v117, %v136
    %vm142 = vc.u32 %v117, %v136
    %v143 = vadd.s32 %v139, 1
    %v144 = vsel %vm142, %v143, %v139
    %v145 = vadd.s32 %v140, %v144
    %v146 = vadd.s32 %v145, 536870912
    %v147 = vshrl.u32 %v146, 30
    %v148 = vshll.u32 %v147, 30
    %v149 = vsub.s32 %v145, %v148
    %vm150 = vcmp.lt.s32.totalorder %v149, 0
    %v151 = vsub.s32 0, %v149
    %v152 = vsel %vm150, %v151, %v149
    %v153 = vclz %v152
    %v154 = vsub.s32 %v153, 2
    %vm155 = vcmp.gt.s32.totalorder 0, %v154
    %v156 = vsel %vm155, 0, %v154
    %v157 = vsub.s32 32, %v156
    %v158 = vshll.u32 %v149, %v156
    %v159 = vshrl.u32 %v141, %v157
    %v160 = vor.u32 %v158, %v159
    %v161 = vsub.s32 4294967266, %v156
    %v162 = vadd.s32 %v161, 127
    %v163 = vshll.u32 %v162, 23
    %v164 = vor.u32 4788187, %v163
    %v165 = vand.u32 2147483647, %v164
    %v167 = vcvt.s32.f32 %v160
    %v168 = vmul.f32 %v167, %v165
    %v169 = vxor.u32 %v168, 2147483648
    %v170 = vsel %vm49, %v169, %v168
    %v171 = vsub.s32 4, %v147
    %v172 = vsel %vm49, %v171, %v147
    %v173 = vsel %vm48, %v46, %v170
    %v174 = vsel %vm48, 0, %v172
    %v175 = vmul.f32 %v173, %v173
    %v176 = vmul.f32 %v175, -0.001358992
    %v177 = vadd.f32 %v176, 0.041655596
    %v178 = vmul.f32 %v175, %v177
    %v179 = vadd.f32 %v178, -0.4999988
    %v180 = vmul.f32 %v175, %v179
    %v181 = vadd.f32 1.0, %v180
    %v182 = vmul.f32 %v173, %v173
    %v183 = vmul.f32 %v182, -0.00019511016
    %v184 = vadd.f32 %v183, 0.008332121
    %v185 = vmul.f32 %v182, %v184
    %v186 = vadd.f32 %v185, -0.16666654
    %v187 = vmul.f32 %v182, %v186
    %v188 = vadd.f32 %v187, 1.0
    %v189 = vmul.f32 %v188, %v173
    %vm190 = vweird.f32 %v46
    %v191 = vand.u32 %v174, 3
    %vm192 = vcmp.lt.s32.totalorder %v191, 2
    %vm193 = vcmp.eq.s32.totalorder %v191, 0
    %v194 = vxor.u32 %v189, 2147483648
    %v195 = vsel %vm193, %v181, %v194
    %vm196 = vcmp.eq.s32.totalorder %v191, 2
    %v197 = vxor.u32 %v181, 2147483648
    %v198 = vsel %vm196, %v197, %v189
    %v199 = vsel %vm192, %v195, %v198
    %v200 = vsel %vm190, nan, %v199
    %v201 = vsub.f32 1.0, %v200
    %203 = vrot.lane.b32.xlu0 %v201, 122
    %v204 = vpop.permute.xlu0 %203
    %vm206 = vcmask 23552
    %v207 = vsel %vm206, %v204, 0.0
    %208 = vadd.xlane.f32.xlu0 %v207
    %v209 = vpop.xlane.xlu0 %208
    %v210 = vld [vmem:[%s1] sm:$0xff]
    %v211 = vld [vmem:[%s2] sm:$0xff]
    %v212 = vsub.f32 %v210, %v211
    %v213 = vmul.f32 %v212, %v212
    %vm214 = vcmask 130048
    %v215 = vsel %vm214, %v213, 0.0
    %216 = vadd.xlane.f32.xlu0 %v215
    %v217 = vpop.xlane.xlu0 %216
    %vm218 = vcmp.eq.s32.totalorder %v17, 0
    %v219 = vmul.f32 %v209, %v41
    %v220 = vsel %vm218, %v219, 1.0
    %v221 = vmul.f32 %v220, %v217
    %vm222 = vcmask 15360
    %v223 = vsel %vm222, %v221, 0.0
    %v224 = vrot.slane %v223, 4
    %v225 = vadd.f32 %v223, %v224
    %v226 = vrot.slane %v225, 2
    %v227 = vadd.f32 %v225, %v226
    %v228 = vrot.slane %v227, 1
    %v229 = vadd.f32 %v227, %v228
    %s230 = vtos %v229
    %s231 = smul.f32 %s230, 0.125
    %s232 = scalar_lea.smem [#allocation2], 0
    %233 = sst [smem:[%s232]] %s231
    %234 = vrot.lane.b32.xlu0 %v229, 127
    %v235 = vpop.permute.xlu0 %234
    %s236 = vtos %v235
    %s237 = smul.f32 %s236, 0.125
    %s238 = scalar_lea.smem [#allocation2], 1
    %239 = sst [smem:[%s238]] %s237
    // Predicated region
    $region14: #{pfld_loss.1} parent=1 // pred_check
      _
    $region15: #{pfld_loss.1} parent=1 // pred_check_branch
      %241 = sbr.rel (0) target = $region17
    $region16: #{pfld_loss.1} parent=1 // pred_region
      %243 = vsyncadd [#allocation3], 0
      %s245 = sshll.u32 %s3, 4
      %s246 = int_to_ptr.vmem [resolvable:$true] %s245
      %248 = dma.smem_to_vmem [#allocation2], 16, %s246, [#allocation3]
    $region17: #{pfld_loss.1} parent=1 // pred_fallthru
      _
    // Predicated region
    $region18: #{pfld_loss.1} parent=1 // pred_check
      _
    $region19: #{pfld_loss.1} parent=1 // pred_check_branch
      %250 = sbr.rel (0) target = $region21
    $region20: #{pfld_loss.1} parent=1 // pred_region
      %252 = dma.done [#allocation3], 16
    $region21: #{pfld_loss.1} parent=1 // pred_fallthru
      _
    %253 = sfence
    %254 = vsyncpa [#allocation3], 1

</llo_original>
